<compile_context>
chip_gen: v5e
topology: v5e:2x2
jax: 0.10.0
libtpu: 0.0.40
codegen_flags: <defaults>
</compile_context>

<pallas_src>
import jax
import jax.numpy as jnp
from jax.experimental import pallas as pl
from jax.experimental.pallas import tpu as pltpu


def _round_up(x, m):
    return (x + m - 1) // m * m


def _divisors_desc(n):
    return [d for d in range(n, 0, -1) if n % d == 0]


def _vmem_caps():
    """(per-tile resident budget, vmem_limit_bytes) derived from the chip."""
    try:
        cap = int(pltpu.get_tpu_info().vmem_capacity_bytes)
    except Exception:
        cap = 64 * 1024 * 1024  # conservative (v7x per-TC VMEM)
    tile_budget = min(int(cap * 0.7), 48 * 1024 * 1024)   # ~44 MiB on v7x, 48 MiB else
    vmem_limit = min(int(cap * 0.9), 100 * 1024 * 1024)
    return tile_budget, vmem_limit


def _build_banded_weight(w_dw, w_pw, Wp, W_out, stride, dilation, dtype):
    """Fused depthwise+pointwise banded GEMM weight.

    wband[kh, wi*Cin + c, w*Cout + co] =
        sum_kw [wi == w*stride + kw*dilation] * w_dw[c,0,kh,kw] * w_pw[co,c,0,0]

    so that  out[t, w*Cout+co] = sum_kh x_rows_kh[t, :] @ wband[kh]
    is exactly depthwise-then-pointwise (no nonlinearity in between).
    """
    Cin = w_dw.shape[0]
    K = w_dw.shape[-1]
    Cout = w_pw.shape[0]
    wdw = jnp.transpose(w_dw[:, 0, :, :], (1, 2, 0)).astype(jnp.float32)   # (K, K, Cin)
    wpw = jnp.transpose(w_pw[:, :, 0, 0], (1, 0)).astype(jnp.float32)      # (Cin, Cout)
    wf = wdw[:, :, :, None] * wpw[None, None, :, :]                        # (K, K, Cin, Cout)

    w_pos = jnp.arange(W_out)
    wband = jnp.zeros((K, Wp * Cin, W_out * Cout), jnp.float32)
    for kw in range(K):
        sel = jnp.zeros((Wp, W_out), jnp.float32)
        sel = sel.at[w_pos * stride + kw * dilation, w_pos].set(1.0)       # (Wp, W_out)
        contrib = jnp.einsum('pw,kcd->kpcwd', sel, wf[:, kw])              # (K,Wp,Cin,W_out,Cout)
        wband = wband + contrib.reshape(K, Wp * Cin, W_out * Cout)
    return wband.astype(dtype)


def _make_kernel(K, stride, dilation, nB, tH, main_rows, has_halo, WpCin, WoCout,
                 compute_dtype):
    """Kernel factory.  All tap/row splits are static Python ints."""

    def rows(ref, r0, n):
        if stride == 1:
            return ref[:, r0:r0 + n, :]
        return ref[:, pl.ds(r0, n, stride), :]

    def body(x_ref, halo_ref, wb_ref, o_ref, acc_ref):
        # x_ref:    (nB, main_rows, Wp*Cin)   rows owned by this H tile
        # halo_ref: (nB, halo_blk,  Wp*Cin)   rows just below the main block
        # wb_ref:   (K,  Wp*Cin, W_out*Cout)  fused banded weight (DMA'd once)
        # o_ref:    (nB, tH, W_out*Cout)      lane-dense output slab
        # acc_ref:  (nB, tH, W_out*Cout) f32  accumulator scratch
        for kh in range(K):
            r0 = kh * dilation
            # Output rows whose tap-kh input row lies inside the main block.
            t_main = min(tH, max(0, -(-(main_rows - r0) // stride)))
            if kh == 0:
                assert t_main == tH, "kh=0 tap must be fully resident"
            if not has_halo:
                assert t_main == tH, "single-tile path must not need halo rows"
            wb = wb_ref[kh]

            if t_main > 0:
                xr = rows(x_ref, r0, t_main).astype(compute_dtype)
                p = jnp.dot(xr.reshape(nB * t_main, WpCin), wb,
                            preferred_element_type=jnp.float32)
                p = p.reshape(nB, t_main, WoCout)
                if kh == 0:
                    acc_ref[...] = p
                else:
                    acc_ref[:, :t_main, :] += p

            if t_main < tH:
                n2 = tH - t_main
                r0h = r0 + t_main * stride - main_rows
                xr2 = rows(halo_ref, r0h, n2).astype(compute_dtype)
                p2 = jnp.dot(xr2.reshape(nB * n2, WpCin), wb,
                             preferred_element_type=jnp.float32)
                acc_ref[:, t_main:, :] += p2.reshape(nB, n2, WoCout)

        o_ref[...] = acc_ref[...].astype(o_ref.dtype)

    if has_halo:
        return body
    return lambda x_ref, wb_ref, o_ref, acc_ref: body(x_ref, None, wb_ref, o_ref, acc_ref)


def separable_conv2d(x_nchw, w_dw, w_pw, *, stride=1, padding=0, dilation=1,
                     vmem_budget_bytes=None):
    """Forward pass of SeparableConv2d.

    x_nchw: (N, Cin, H, W); w_dw: (Cin, 1, K, K); w_pw: (Cout, Cin, 1, 1).
    Returns (N, Cout, H_out, W_out).
    """
    N, Cin, H, W = x_nchw.shape
    K = w_dw.shape[-1]
    Cout = w_pw.shape[0]
    assert w_dw.shape == (Cin, 1, K, K)
    assert w_pw.shape == (Cout, Cin, 1, 1)

    H_out = (H + 2 * padding - dilation * (K - 1) - 1) // stride + 1
    W_out = (W + 2 * padding - dilation * (K - 1) - 1) // stride + 1
    assert H_out > 0 and W_out > 0

    # ---- HBM glue: NCHW -> NHWC, zero-pad, lane-pack W*Cin -------------------
    x = jnp.transpose(x_nchw, (0, 2, 3, 1))
    if padding:
        x = jnp.pad(x, ((0, 0), (padding, padding), (padding, padding), (0, 0)))
    Hp, Wp = x.shape[1], x.shape[2]
    WpCin = Wp * Cin
    WoCout = W_out * Cout
    x = x.reshape(N, Hp, WpCin)

    out_dtype = x_nchw.dtype
    in_isz = jnp.dtype(x.dtype).itemsize
    out_isz = jnp.dtype(out_dtype).itemsize
    compute_dtype = jnp.bfloat16 if x.dtype == jnp.bfloat16 else jnp.float32
    w_isz = jnp.dtype(compute_dtype).itemsize
    wband_bytes = K * WpCin * WoCout * w_isz
    if wband_bytes > 16 * 1024 * 1024:
        # TODO(synk): add a Cin-on-lanes two-stage path for big-channel layers.
        raise NotImplementedError(
            "fused banded weight is %d bytes; this kernel targets the "
            "small-channel regime" % wband_bytes)

    tile_budget, vmem_limit = _vmem_caps()
    if vmem_budget_bytes is not None:
        tile_budget = int(vmem_budget_bytes)

    halo = (K - 1) * dilation
    halo_blk = max(8, _round_up(halo, 8))

    def resident_bytes(nB, tH, tiled):
        main_rows = tH * stride if tiled else Hp
        b = 2 * nB * main_rows * WpCin * in_isz              # main block (double-buffered)
        if tiled:
            b += 2 * nB * halo_blk * WpCin * in_isz          # halo block
        b += 2 * nB * tH * WoCout * out_isz                  # output block
        b += 2 * wband_bytes                                 # fused weight
        b += nB * tH * WoCout * 4                            # f32 accumulator scratch
        return b

    # ---- batch blocking (prefer >= 2 grid steps when N > 1: megacore) -------
    nB = 1
    for cand in _divisors_desc(N):
        if N > 1 and cand == N:
            continue
        if resident_bytes(cand, H_out, tiled=False) <= tile_budget:
            nB = cand
            break

    # ---- H tiling only when a whole image does not fit the budget ------------
    tH, tiled = H_out, False
    if resident_bytes(nB, H_out, tiled=False) > tile_budget:
        nB = 1
        cands = [t for t in range(8, H_out, 8)
                 if H_out % t == 0 and t * stride >= halo]
        fitting = [t for t in cands if resident_bytes(1, t, True) <= tile_budget]
        if fitting:
            tH, tiled = max(fitting), True
        elif cands:
            tH, tiled = min(cands), True
        # else: no legal 8-aligned H tile; keep a single (oversized) tile.

    n_h = H_out // tH
    grid = (N // nB, n_h)

    # ---- operands -------------------------------------------------------------
    wband = _build_banded_weight(w_dw, w_pw, Wp, W_out, stride, dilation,
                                 compute_dtype)

    if tiled:
        main_rows = tH * stride
        assert main_rows % 8 == 0
        assert main_rows % halo_blk == 0, (
            "halo-block index math requires tH*stride to be a multiple of the "
            "8-row-aligned halo block size")
        assert halo <= halo_blk
        rows_needed = n_h * main_rows + halo_blk
        if Hp < rows_needed:
            x = jnp.pad(x, ((0, 0), (0, rows_needed - Hp), (0, 0)))
    else:
        main_rows = Hp

    kernel = _make_kernel(K, stride, dilation, nB, tH, main_rows, tiled,
                          WpCin, WoCout, compute_dtype)

    in_specs = [pl.BlockSpec((nB, main_rows, WpCin), lambda b, j: (b, j, 0))]
    operands = [x]
    if tiled:
        ratio = main_rows // halo_blk
        in_specs.append(pl.BlockSpec((nB, halo_blk, WpCin),
                                     lambda b, j: (b, (j + 1) * ratio, 0)))
        operands.append(x)  # second (halo) view of the same array
    in_specs.append(pl.BlockSpec((K, WpCin, WoCout), lambda b, j: (0, 0, 0)))
    operands.append(wband)

    flops = 2 * K * N * H_out * WpCin * WoCout
    bytes_accessed = (
        N * n_h * (main_rows + (halo_blk if tiled else 0)) * WpCin * in_isz
        + wband_bytes
        + N * H_out * WoCout * out_isz)

    out_slab = pl.pallas_call(
        kernel,
        out_shape=jax.ShapeDtypeStruct((N, H_out, WoCout), out_dtype),
        grid_spec=pltpu.PrefetchScalarGridSpec(
            num_scalar_prefetch=0,
            grid=grid,
            in_specs=in_specs,
            out_specs=pl.BlockSpec((nB, tH, WoCout), lambda b, j: (b, j, 0)),
            scratch_shapes=[pltpu.VMEM((nB, tH, WoCout), jnp.float32)]),
        compiler_params=pltpu.CompilerParams(
            dimension_semantics=("parallel", "parallel"),
            vmem_limit_bytes=vmem_limit),
        cost_estimate=pl.CostEstimate(flops=int(flops), transcendentals=0,
                                      bytes_accessed=int(bytes_accessed)),
    )(*operands)

    # (N, H_out, W_out*Cout) -> NHWC -> NCHW.
    out = out_slab.reshape(N, H_out, W_out, Cout)
    return jnp.transpose(out, (0, 3, 1, 2))


def _reference(x_nchw, w_dw, w_pw, *, stride, padding, dilation):
    Cin = x_nchw.shape[1]
    dw = jax.lax.conv_general_dilated(
        x_nchw, w_dw,
        window_strides=(stride, stride),
        padding=((padding, padding), (padding, padding)),
        rhs_dilation=(dilation, dilation),
        dimension_numbers=("NCHW", "OIHW", "NCHW"),
        feature_group_count=Cin)
    return jax.lax.conv_general_dilated(
        dw, w_pw,
        window_strides=(1, 1),
        padding=((0, 0), (0, 0)),
        dimension_numbers=("NCHW", "OIHW", "NCHW"))


if __name__ == "__main__":
    key = jax.random.PRNGKey(0)
    k_x, k_dw, k_pw = jax.random.split(key, 3)

    N, Cin, H, W = 2, 4, 16, 16
    Cout, K = 8, 3

    x = jax.random.normal(k_x, (N, Cin, H, W), dtype=jnp.float32)
    # bias=False in the module, so only the two conv weights.
    w_dw = jax.random.normal(k_dw, (Cin, 1, K, K), dtype=jnp.float32) * 0.1
    w_pw = jax.random.normal(k_pw, (Cout, Cin, 1, 1), dtype=jnp.float32) * 0.1

    configs = [
        # padding=1: lane-dense 128-wide output, one fat tile per image.
        dict(stride=1, padding=1, dilation=1, vmem_budget_bytes=None),
        # padding=0: H_out/W_out = 14, single-tile path with non-128 lane width.
        dict(stride=1, padding=0, dilation=1, vmem_budget_bytes=None),
        # tiny forced budget: exercises the H-tiled path with halo splitting.
        dict(stride=1, padding=1, dilation=1, vmem_budget_bytes=64 * 1024),
    ]
    for cfg in configs:
        budget = cfg.pop("vmem_budget_bytes")
        out = separable_conv2d(x, w_dw, w_pw, vmem_budget_bytes=budget, **cfg)
        out = jax.block_until_ready(out)
        ref = _reference(x, w_dw, w_pw, **cfg)
        assert out.shape == ref.shape, (out.shape, ref.shape)
        assert jnp.allclose(out, ref, atol=1e-4, rtol=1e-4), cfg

    print("KERNEL_OK")
</pallas_src>

<mosaic_0001>
module attributes {stable_mosaic.version = 11 : i64} {
  func.func @_lambda_(%arg0: i32, %arg1: i32, %arg2: memref<1x18x72xf32, #tpu.memory_space<vmem>>, %arg3: memref<3x72x128xf32, #tpu.memory_space<vmem>>, %arg4: memref<1x16x128xf32, #tpu.memory_space<vmem>>, %arg5: memref<1x16x128xf32, #tpu.memory_space<vmem>>) attributes {dimension_semantics = [#tpu.dimension_semantics<parallel>, #tpu.dimension_semantics<parallel>], iteration_bounds = array<i64: 2, 1>, scalar_prefetch = 0 : i64, scratch_operands = 1 : i64, tpu.core_type = #tpu.core_type<tc>, window_params = [{transform_indices = @transform_0, window_bounds = array<i64: 1, 18, 72>}, {pipeline_mode = #tpu.pipeline_mode<synchronous>, transform_indices = @transform_1, window_bounds = array<i64: 3, 72, 128>}, {transform_indices = @transform_2, window_bounds = array<i64: 1, 16, 128>}]} {
    %c0 = arith.constant 0 : index
    %c0_0 = arith.constant 0 : index
    %c0_1 = arith.constant 0 : index
    %0 = vector.load %arg3[%c0, %c0_0, %c0_1] : memref<3x72x128xf32, #tpu.memory_space<vmem>>, vector<1x72x128xf32>
    %1 = vector.shape_cast %0 : vector<1x72x128xf32> to vector<72x128xf32>
    %c0_2 = arith.constant 0 : index
    %c0_3 = arith.constant 0 : index
    %c0_4 = arith.constant 0 : index
    %2 = vector.load %arg2[%c0_2, %c0_3, %c0_4] : memref<1x18x72xf32, #tpu.memory_space<vmem>>, vector<1x16x72xf32>
    %3 = vector.shape_cast %2 : vector<1x16x72xf32> to vector<16x72xf32>
    %cst = arith.constant dense<0.000000e+00> : vector<16x128xf32>
    %4 = tpu.matmul %3, %1, %cst {dimension_numbers = #tpu.dot_dimension_numbers<[1], [0], [0], [1], [0, 0, 1, 1], [], []>} : vector<16x72xf32>, vector<72x128xf32>, vector<16x128xf32> -> vector<16x128xf32>
    %5 = vector.shape_cast %4 : vector<16x128xf32> to vector<1x16x128xf32>
    %c0_5 = arith.constant 0 : index
    %c0_6 = arith.constant 0 : index
    %c0_7 = arith.constant 0 : index
    %6 = vector.load %arg5[%c0_5, %c0_6, %c0_7] : memref<1x16x128xf32, #tpu.memory_space<vmem>>, vector<1x16x128xf32>
    tpu.vector_store %arg5[%c0_5, %c0_6, %c0_7], %5 {strides = array<i32>} : memref<1x16x128xf32, #tpu.memory_space<vmem>>, vector<1x16x128xf32>,
    %c1 = arith.constant 1 : index
    %c0_8 = arith.constant 0 : index
    %c0_9 = arith.constant 0 : index
    %7 = vector.load %arg3[%c1, %c0_8, %c0_9] : memref<3x72x128xf32, #tpu.memory_space<vmem>>, vector<1x72x128xf32>
    %8 = vector.shape_cast %7 : vector<1x72x128xf32> to vector<72x128xf32>
    %c0_10 = arith.constant 0 : index
    %c1_11 = arith.constant 1 : index
    %c0_12 = arith.constant 0 : index
    %9 = vector.load %arg2[%c0_10, %c1_11, %c0_12] : memref<1x18x72xf32, #tpu.memory_space<vmem>>, vector<1x16x72xf32>
    %10 = vector.shape_cast %9 : vector<1x16x72xf32> to vector<16x72xf32>
    %cst_13 = arith.constant dense<0.000000e+00> : vector<16x128xf32>
    %11 = tpu.matmul %10, %8, %cst_13 {dimension_numbers = #tpu.dot_dimension_numbers<[1], [0], [0], [1], [0, 0, 1, 1], [], []>} : vector<16x72xf32>, vector<72x128xf32>, vector<16x128xf32> -> vector<16x128xf32>
    %12 = vector.shape_cast %11 : vector<16x128xf32> to vector<1x16x128xf32>
    %c0_14 = arith.constant 0 : index
    %c0_15 = arith.constant 0 : index
    %c0_16 = arith.constant 0 : index
    %13 = vector.load %arg5[%c0_14, %c0_15, %c0_16] : memref<1x16x128xf32, #tpu.memory_space<vmem>>, vector<1x16x128xf32>
    %14 = arith.addf %13, %12 : vector<1x16x128xf32>
    %c0_17 = arith.constant 0 : index
    %c0_18 = arith.constant 0 : index
    %c0_19 = arith.constant 0 : index
    %15 = vector.load %arg5[%c0_17, %c0_18, %c0_19] : memref<1x16x128xf32, #tpu.memory_space<vmem>>, vector<1x16x128xf32>
    tpu.vector_store %arg5[%c0_17, %c0_18, %c0_19], %14 {strides = array<i32>} : memref<1x16x128xf32, #tpu.memory_space<vmem>>, vector<1x16x128xf32>,
    %c2 = arith.constant 2 : index
    %c0_20 = arith.constant 0 : index
    %c0_21 = arith.constant 0 : index
    %16 = vector.load %arg3[%c2, %c0_20, %c0_21] : memref<3x72x128xf32, #tpu.memory_space<vmem>>, vector<1x72x128xf32>
    %17 = vector.shape_cast %16 : vector<1x72x128xf32> to vector<72x128xf32>
    %c0_22 = arith.constant 0 : index
    %c2_23 = arith.constant 2 : index
    %c0_24 = arith.constant 0 : index
    %18 = vector.load %arg2[%c0_22, %c2_23, %c0_24] : memref<1x18x72xf32, #tpu.memory_space<vmem>>, vector<1x16x72xf32>
    %19 = vector.shape_cast %18 : vector<1x16x72xf32> to vector<16x72xf32>
    %cst_25 = arith.constant dense<0.000000e+00> : vector<16x128xf32>
    %20 = tpu.matmul %19, %17, %cst_25 {dimension_numbers = #tpu.dot_dimension_numbers<[1], [0], [0], [1], [0, 0, 1, 1], [], []>} : vector<16x72xf32>, vector<72x128xf32>, vector<16x128xf32> -> vector<16x128xf32>
    %21 = vector.shape_cast %20 : vector<16x128xf32> to vector<1x16x128xf32>
    %c0_26 = arith.constant 0 : index
    %c0_27 = arith.constant 0 : index
    %c0_28 = arith.constant 0 : index
    %22 = vector.load %arg5[%c0_26, %c0_27, %c0_28] : memref<1x16x128xf32, #tpu.memory_space<vmem>>, vector<1x16x128xf32>
    %23 = arith.addf %22, %21 : vector<1x16x128xf32>
    %c0_29 = arith.constant 0 : index
    %c0_30 = arith.constant 0 : index
    %c0_31 = arith.constant 0 : index
    %24 = vector.load %arg5[%c0_29, %c0_30, %c0_31] : memref<1x16x128xf32, #tpu.memory_space<vmem>>, vector<1x16x128xf32>
    tpu.vector_store %arg5[%c0_29, %c0_30, %c0_31], %23 {strides = array<i32>} : memref<1x16x128xf32, #tpu.memory_space<vmem>>, vector<1x16x128xf32>,
    %c0_32 = arith.constant 0 : index
    %c0_33 = arith.constant 0 : index
    %c0_34 = arith.constant 0 : index
    %25 = vector.load %arg5[%c0_32, %c0_33, %c0_34] : memref<1x16x128xf32, #tpu.memory_space<vmem>>, vector<1x16x128xf32>
    %c0_35 = arith.constant 0 : index
    %c0_36 = arith.constant 0 : index
    %c0_37 = arith.constant 0 : index
    %26 = vector.load %arg4[%c0_35, %c0_36, %c0_37] : memref<1x16x128xf32, #tpu.memory_space<vmem>>, vector<1x16x128xf32>
    tpu.vector_store %arg4[%c0_35, %c0_36, %c0_37], %25 {strides = array<i32>} : memref<1x16x128xf32, #tpu.memory_space<vmem>>, vector<1x16x128xf32>,
    return
  }
  func.func @transform_0(%arg0: i32, %arg1: i32) -> (i32, i32, i32) {
    %c0_i32 = arith.constant 0 : i32
    %c0_i32_0 = arith.constant 0 : i32
    return %arg0, %arg1, %c0_i32 : i32, i32, i32
  }
  func.func @transform_1(%arg0: i32, %arg1: i32) -> (i32, i32, i32) {
    %c0_i32 = arith.constant 0 : i32
    %c0_i32_0 = arith.constant 0 : i32
    %c0_i32_1 = arith.constant 0 : i32
    %c0_i32_2 = arith.constant 0 : i32
    return %c0_i32, %c0_i32_0, %c0_i32_1 : i32, i32, i32
  }
  func.func @transform_2(%arg0: i32, %arg1: i32) -> (i32, i32, i32) {
    %c0_i32 = arith.constant 0 : i32
    %c0_i32_0 = arith.constant 0 : i32
    return %arg0, %arg1, %c0_i32 : i32, i32, i32
  }
}

</mosaic_0001>

<llo_original>
// kernel: tpu_custom_call.1
$region0: #{tpu_custom_call.1}
  #allocation0 [shape = 'u32[]', space=smem, size = 0x4, offset = 0x4, fixed_abs, tag = 'smem constant byte address 0x4 - core index']
  #allocation1 [shape = 'u32[72,128]{1,0:T(1,128)}', space=vmem, size = 0x9000, scoped, tag = 'internal scratch']
  #allocation2 [shape = 'f32[1,16,128]{2,1,0:T(8,128)}', space=vmem, size = 0x2000, scoped, tag = 'scratch operand']
  %s0 = inlined_call_operand.vmem [shape: f32[2,18,72], index: 0, kind: input, shape index: {}]
  %s1 = inlined_call_operand.hbm [shape: f32[3,72,128], index: 1, kind: input, shape index: {}]
  %s2 = inlined_call_operand.hbm [shape: f32[2,16,128], index: 2, kind: output, shape index: {}]
  %s3 = sld [smem:[#allocation0]]
  $region45: #{tpu_custom_call.1} parent=0
    _
  %s5 = ssub.s32 1, %s3
  %s6 = scalar_select 0, %s5, %s3
  $region1: #{tpu_custom_call.1} parent=0
    #allocation3 [shape = 'u8[110592]{0}', space=vmem, size = 0x1b000, scoped, tag = 'input window, operand 1, single buffered']
    #allocation4 [shape = 's32[2]{0}', space=sflag, size = 0x8, scoped, tag = 'scoped memory for tpu_custom_call.1']
    #allocation5 [shape = 's32[2]{0}', space=sflag, size = 0x8, scoped, tag = 'scoped memory for tpu_custom_call.1']
    #allocation6 [shape = 'u8[16384]{0}', space=vmem, size = 0x4000, scoped, tag = 'output window, operand 0']
    %7 = vsyncpa [#allocation4], 0
    %8 = vsyncpa [#allocation5], 0
    %s9 = scalar_lea.sflag [#allocation5], 1
    %10 = vsyncpa %s9, 0
    loop: start=0, step=1, limit=4
    $region2: #{tpu_custom_call.1} parent=1 // loop_pre_header
      _
    $region3: #{tpu_custom_call.1} parent=1 // loop_header
      %s12 = sphi 0, %s16
      %p13 = scmp.ge.s32.totalorder %s12, 4
      %s19 = sphi 0, %s31
      %s20 = sphi 0, %s27
      %s21 = sphi 0, %s19
      %s22 = sphi 0, %s20
      %s23 = sphi 0, %s21
      %s24 = sphi 0, %s22
      %s36 = sphi 0, %s38
      %s39 = sphi 0, %s36
      %s40 = sphi 0, %s39
      %s56 = sphi 0, %s40
      %s60 = sphi 0, %s60
      %s62 = sphi 0, %s60
      %s63 = sphi 0, %s62
      %s77 = sphi 0, %s63
      %s85 = sphi 0, %s87
      %s88 = sphi 0, %s85
      %s89 = sphi 0, %s88
      %s105 = sphi 0, %s89
    $region4: #{tpu_custom_call.1} parent=1 // loop_header_branch
      %15 = sbr.rel (%p13) target = $region8
    $region5: #{tpu_custom_call.1} parent=1 // loop_body
      %s17 = ssub.s32 %s12, 1
      %s18 = ssub.s32 %s12, 2
      %s25 = sadd.s32 1, %s20
      %p26 = scmp.ge.s32.totalorder %s25, 1
      %s27 = scalar_select %p26, 0, %s25
      %s28 = sadd.s32 1, %s19
      %s29 = scalar_select %p26, %s28, %s19
      %p30 = scmp.ge.s32.totalorder %s29, 2
      %s31 = scalar_select %p30, 0, %s29
      %s32 = ssub.s32 %s19, %s31
      %s33 = ssub.s32 %s20, %s27
      %s34 = sor.u32 %s32, %s33
      %p35 = scmp.eq.s32.totalorder %s34, 0
      %s37 = sadd.s32 %s36, 1
      %s38 = scalar_select %p35, %s36, %s37
      %p41 = pneg %p35
      %p42 = scmp.eq.s32.totalorder %s12, 1
      %p43 = por %p41, %p42
      %p44 = scmp.ne.s32.totalorder %s36, %s39
      %p45 = scmp.eq.s32.totalorder %s12, 0
      %p46 = por %p44, %p45
      %p47 = scmp.ne.s32.totalorder %s36, %s39
      %p48 = scmp.eq.s32.totalorder %s17, 1
      %p49 = por %p47, %p48
      %p50 = scmp.ne.s32.totalorder %s39, %s40
      %p51 = scmp.eq.s32.totalorder %s17, 0
      %p52 = por %p50, %p51
      %p53 = scmp.ne.s32.totalorder %s39, %s40
      %p54 = scmp.eq.s32.totalorder %s18, 1
      %p55 = por %p53, %p54
      %p57 = scmp.ne.s32.totalorder %s40, %s56
      %p58 = scmp.eq.s32.totalorder %s18, 0
      %p59 = por %p57, %p58
      %s61 = sadd.s32 %s60, 1
      %p64 = scmp.eq.s32.totalorder %s12, 1
      %p65 = scmp.ne.s32.totalorder %s60, %s62
      %p66 = scmp.eq.s32.totalorder %s12, 0
      %p67 = por %p65, %p66
      %p68 = scmp.ne.s32.totalorder %s60, %s62
      %p69 = scmp.eq.s32.totalorder %s17, 1
      %p70 = por %p68, %p69
      %p71 = scmp.ne.s32.totalorder %s62, %s63
      %p72 = scmp.eq.s32.totalorder %s17, 0
      %p73 = por %p71, %p72
      %p74 = scmp.ne.s32.totalorder %s62, %s63
      %p75 = scmp.eq.s32.totalorder %s18, 1
      %p76 = por %p74, %p75
      %p78 = scmp.ne.s32.totalorder %s63, %s77
      %p79 = scmp.eq.s32.totalorder %s18, 0
      %p80 = por %p78, %p79
      %s81 = ssub.s32 %s19, %s31
      %s82 = ssub.s32 %s20, %s27
      %s83 = sor.u32 %s81, %s82
      %p84 = scmp.eq.s32.totalorder %s83, 0
      %s86 = sadd.s32 %s85, 1
      %s87 = scalar_select %p84, %s85, %s86
      %p90 = pneg %p84
      %p91 = scmp.eq.s32.totalorder %s12, 1
      %p92 = por %p90, %p91
      %p93 = scmp.ne.s32.totalorder %s85, %s88
      %p94 = scmp.eq.s32.totalorder %s12, 0
      %p95 = por %p93, %p94
      %p96 = scmp.ne.s32.totalorder %s85, %s88
      %p97 = scmp.eq.s32.totalorder %s17, 1
      %p98 = por %p96, %p97
      %p99 = scmp.ne.s32.totalorder %s88, %s89
      %p100 = scmp.eq.s32.totalorder %s17, 0
      %p101 = por %p99, %p100
      %p102 = scmp.ne.s32.totalorder %s88, %s89
      %p103 = scmp.eq.s32.totalorder %s18, 1
      %p104 = por %p102, %p103
      %p106 = scmp.ne.s32.totalorder %s89, %s105
      %p107 = scmp.eq.s32.totalorder %s18, 0
      %p108 = por %p106, %p107
      %p109 = scmp.le.s32.totalorder 1, %s12
      %p110 = scmp.lt.s32.totalorder %s12, 3
      %p111 = pnand %p109, %p110
      %p112 = pneg %p111
      // Predicated region
      $region9: #{tpu_custom_call.1} parent=5 // pred_check
        _
      $region10: #{tpu_custom_call.1} parent=5 // pred_check_branch
        %114 = sbr.rel (%p111) target = $region12
      $region11: #{tpu_custom_call.1} parent=5 // pred_region
        %s115 = ssub.s32 %s12, 1
        // Predicated region
        $region13: #{tpu_custom_call.1} parent=11 // pred_check
          %p116 = pneg %p73
        $region14: #{tpu_custom_call.1} parent=11 // pred_check_branch
          %118 = sbr.rel (%p116) target = $region16
        $region15: #{tpu_custom_call.1} parent=11 // pred_region
          %120 = vsyncadd [#allocation4], 0
          %s121 = sshll.u32 %s1, 4
          %s122 = int_to_ptr.hbm [resolvable:$true] %s121
          %s123 = sshll.u32 [#allocation3], 4
          %s124 = int_to_ptr.vmem [resolvable:$true] %s123
          %129 = dma.hbm_to_vmem [thread:$0]  %s122, 3456, %s124, [#allocation4], 128, 128, 8
        $region16: #{tpu_custom_call.1} parent=11 // pred_fallthru
          _
      $region12: #{tpu_custom_call.1} parent=5 // pred_fallthru
        _
      %p130 = scmp.lt.s32.totalorder %s12, 2
      // Predicated region
      $region17: #{tpu_custom_call.1} parent=5 // pred_check
        %p131 = pneg %p130
      $region18: #{tpu_custom_call.1} parent=5 // pred_check_branch
        %133 = sbr.rel (%p131) target = $region20
      $region19: #{tpu_custom_call.1} parent=5 // pred_region
        // Predicated region
        $region21: #{tpu_custom_call.1} parent=19 // pred_check
          %p134 = pneg %p46
        $region22: #{tpu_custom_call.1} parent=19 // pred_check_branch
          %136 = sbr.rel (%p134) target = $region24
        $region23: #{tpu_custom_call.1} parent=19 // pred_region
          %s137 = smul.u32 3, %s20
          %p138 = scmp.lt.s32.totalorder %s19, 1
          %s139 = scalar_select %p138, %s19, 1
          %p140 = scmp.lt.s32.totalorder %s137, 2
          %s141 = scalar_select %p140, %s137, 2
          %s142 = smul.addr %s139, 3
          %s143 = sadd.s32 %s141, %s142
          %s144 = smul.addr %s143, 8
          %s145 = scalar_lea.vmem %s0, %s144
          %s146 = smul.u32 3, %s20
        $region24: #{tpu_custom_call.1} parent=19 // pred_fallthru
          _
      $region20: #{tpu_custom_call.1} parent=5 // pred_fallthru
        _
      %p147 = scmp.le.s32.totalorder 1, %s12
      %p148 = scmp.lt.s32.totalorder %s12, 3
      %p149 = pnand %p147, %p148
      %p150 = pneg %p149
      // Predicated region
      $region25: #{tpu_custom_call.1} parent=5 // pred_check
        _
      $region26: #{tpu_custom_call.1} parent=5 // pred_check_branch
        %152 = sbr.rel (%p149) target = $region28
      $region27: #{tpu_custom_call.1} parent=5 // pred_region
        %s153 = ssub.s32 %s12, 1
        // Predicated region
        $region29: #{tpu_custom_call.1} parent=27 // pred_check
          %p154 = pneg %p73
        $region30: #{tpu_custom_call.1} parent=27 // pred_check_branch
          %156 = sbr.rel (%p154) target = $region32
        $region31: #{tpu_custom_call.1} parent=27 // pred_region
          %158 = dma.done [#allocation4], 3456
        $region32: #{tpu_custom_call.1} parent=27 // pred_fallthru
          _
        %s159 = smul.u32 3, %s22
        %p160 = scmp.lt.s32.totalorder %s21, 1
        %s161 = scalar_select %p160, %s21, 1
        %p162 = scmp.lt.s32.totalorder %s159, 2
        %s163 = scalar_select %p162, %s159, 2
        %s164 = smul.addr %s161, 3
        %s165 = sadd.s32 %s163, %s164
        %s166 = smul.addr %s165, 8
        %s167 = scalar_lea.vmem %s0, %s166
        %p168 = pneg %p52
        %p169 = pneg %p49
        %p170 = pneg %p73
        %p171 = pneg %p70
        %p172 = pneg %p101
        %p173 = pneg %p98
        %s174 = sand.u32 %s88, 1
        %s175 = scalar_lea.sflag [#allocation5], %s174
        %s176 = sand.u32 %s88, 1
        %s177 = smul.addr %s176, 16
        %s178 = scalar_lea.vmem [#allocation6], %s177
        %s179 = smul.u32 3, %s22
        %p180 = scmp.lt.s32.totalorder %s21, 1
        %s181 = scalar_select %p180, %s21, 1
        %p182 = scmp.lt.s32.totalorder %s179, 2
        %s183 = scalar_select %p182, %s179, 2
        %s184 = smul.addr %s181, 3
        %s185 = sadd.s32 %s183, %s184
        %s186 = smul.addr %s185, 8
        %s187 = scalar_lea.vmem %s0, %s186
        %s188 = smul.u32 3, %s22
        %s189 = smul.u32 2, %s22
        %v190 = vld [vmem:[#allocation3] sm:$0xff]
        %v191 = vld [vmem:[#allocation3 + $0x8] sm:$0xff]
        %v192 = vld [vmem:[#allocation3 + $0x10] sm:$0xff]
        %v193 = vld [vmem:[#allocation3 + $0x18] sm:$0xff]
        %v194 = vld [vmem:[#allocation3 + $0x20] sm:$0xff]
        %v195 = vld [vmem:[#allocation3 + $0x28] sm:$0xff]
        %v196 = vld [vmem:[#allocation3 + $0x30] sm:$0xff]
        %v197 = vld [vmem:[#allocation3 + $0x38] sm:$0xff]
        %v198 = vld [vmem:[#allocation3 + $0x40] sm:$0xff]
        %v199 = vld [vmem:[%s187] sm:$0xff]
        %v200 = vld [vmem:[%s187 + $0x8] sm:$0xff]
        %vm201 = vcmask 588800
        %v203 = vsel %vm201, %v199, 0
        %v206 = vsel %vm201, %v200, 0
        %208 = vmatpush.msra.mxu0 0.0
        %209 = vmatpush.msra.mxu0 0.0
        %210 = vmatpush.msra.mxu0 0.0
        %211 = vmatpush.msra.mxu0 0.0
        %212 = vmatpush.msra.mxu0 0.0
        %213 = vmatpush.msra.mxu0 0.0
        %214 = vmatpush.msra.mxu0 0.0
        %215 = vmatpush.msra.mxu0 %v198
        %216 = vmatpush.msra.mxu0 %v197
        %217 = vmatpush.msra.mxu0 %v196
        %218 = vmatpush.msra.mxu0 %v195
        %219 = vmatpush.msra.mxu0 %v194
        %220 = vmatpush.msra.mxu0 %v193
        %221 = vmatpush.msra.mxu0 %v192
        %222 = vmatpush.msra.mxu0 %v191
        %223 = vmatpush.msra.mxu0 %v190
        %224 = vmatmul.f32.gmra.mxu0 %v203
        %v225 = vpop.f32.mrf.mxu0
        %v226 = vadd.f32 0.0, %v225
        %227 = vmatmul.f32.gmra.mxu0 %v206
        %v228 = vpop.f32.mrf.mxu0
        %v229 = vadd.f32 0.0, %v228
        %230 = vdwg.mxu0
        %231 = vst [vmem:[#allocation2] sm:$0xff] %v226
        %232 = vst [vmem:[#allocation2 + $0x8] sm:$0xff] %v229
        %s233 = scalar_lea.vmem [#allocation3], 72
        %v234 = vld [vmem:[%s233] sm:$0xff]
        %v235 = vld [vmem:[%s233 + $0x8] sm:$0xff]
        %v236 = vld [vmem:[%s233 + $0x10] sm:$0xff]
        %v237 = vld [vmem:[%s233 + $0x18] sm:$0xff]
        %v238 = vld [vmem:[%s233 + $0x20] sm:$0xff]
        %v239 = vld [vmem:[%s233 + $0x28] sm:$0xff]
        %v240 = vld [vmem:[%s233 + $0x30] sm:$0xff]
        %v241 = vld [vmem:[%s233 + $0x38] sm:$0xff]
        %v242 = vld [vmem:[%s233 + $0x40] sm:$0xff]
        %v243 = vld [vmem:[%s187 + $0x1] sm:$0xff]
        %v244 = vld [vmem:[%s187 + $0x9] sm:$0xff]
        %v246 = vsel %vm201, %v243, 0
        %v249 = vsel %vm201, %v244, 0
        %251 = vmatpush.msra.mxu0 0.0
        %252 = vmatpush.msra.mxu0 0.0
        %253 = vmatpush.msra.mxu0 0.0
        %254 = vmatpush.msra.mxu0 0.0
        %255 = vmatpush.msra.mxu0 0.0
        %256 = vmatpush.msra.mxu0 0.0
        %257 = vmatpush.msra.mxu0 0.0
        %258 = vmatpush.msra.mxu0 %v242
        %259 = vmatpush.msra.mxu0 %v241
        %260 = vmatpush.msra.mxu0 %v240
        %261 = vmatpush.msra.mxu0 %v239
        %262 = vmatpush.msra.mxu0 %v238
        %263 = vmatpush.msra.mxu0 %v237
        %264 = vmatpush.msra.mxu0 %v236
        %265 = vmatpush.msra.mxu0 %v235
        %266 = vmatpush.msra.mxu0 %v234
        %267 = vmatmul.f32.gmra.mxu0 %v246
        %v268 = vpop.f32.mrf.mxu0
        %v269 = vadd.f32 0.0, %v268
        %270 = vmatmul.f32.gmra.mxu0 %v249
        %v271 = vpop.f32.mrf.mxu0
        %v272 = vadd.f32 0.0, %v271
        %273 = vdwg.mxu0
        %v274 = vld [vmem:[#allocation2] sm:$0xff]
        %v275 = vld [vmem:[#allocation2 + $0x8] sm:$0xff]
        %v276 = vadd.f32 %v274, %v269
        %v277 = vadd.f32 %v275, %v272
        %278 = vst [vmem:[#allocation2] sm:$0xff] %v276
        %279 = vst [vmem:[#allocation2 + $0x8] sm:$0xff] %v277
        %s280 = scalar_lea.vmem [#allocation3], 144
        %v281 = vld [vmem:[%s280] sm:$0xff]
        %v282 = vld [vmem:[%s280 + $0x8] sm:$0xff]
        %v283 = vld [vmem:[%s280 + $0x10] sm:$0xff]
        %v284 = vld [vmem:[%s280 + $0x18] sm:$0xff]
        %v285 = vld [vmem:[%s280 + $0x20] sm:$0xff]
        %v286 = vld [vmem:[%s280 + $0x28] sm:$0xff]
        %v287 = vld [vmem:[%s280 + $0x30] sm:$0xff]
        %v288 = vld [vmem:[%s280 + $0x38] sm:$0xff]
        %v289 = vld [vmem:[%s280 + $0x40] sm:$0xff]
        %v290 = vld [vmem:[%s187 + $0x2] sm:$0xff]
        %v291 = vld [vmem:[%s187 + $0xa] sm:$0xff]
        %v293 = vsel %vm201, %v290, 0
        %v296 = vsel %vm201, %v291, 0
        %298 = vmatpush.msra.mxu0 0.0
        %299 = vmatpush.msra.mxu0 0.0
        %300 = vmatpush.msra.mxu0 0.0
        %301 = vmatpush.msra.mxu0 0.0
        %302 = vmatpush.msra.mxu0 0.0
        %303 = vmatpush.msra.mxu0 0.0
        %304 = vmatpush.msra.mxu0 0.0
        %305 = vmatpush.msra.mxu0 %v289
        %306 = vmatpush.msra.mxu0 %v288
        %307 = vmatpush.msra.mxu0 %v287
        %308 = vmatpush.msra.mxu0 %v286
        %309 = vmatpush.msra.mxu0 %v285
        %310 = vmatpush.msra.mxu0 %v284
        %311 = vmatpush.msra.mxu0 %v283
        %312 = vmatpush.msra.mxu0 %v282
        %313 = vmatpush.msra.mxu0 %v281
        %314 = vmatmul.f32.gmra.mxu0 %v293
        %v315 = vpop.f32.mrf.mxu0
        %v316 = vadd.f32 0.0, %v315
        %317 = vmatmul.f32.gmra.mxu0 %v296
        %v318 = vpop.f32.mrf.mxu0
        %v319 = vadd.f32 0.0, %v318
        %320 = vdwg.mxu0
        %v321 = vld [vmem:[#allocation2] sm:$0xff]
        %v322 = vld [vmem:[#allocation2 + $0x8] sm:$0xff]
        %v323 = vadd.f32 %v321, %v316
        %v324 = vadd.f32 %v322, %v319
        %325 = vst [vmem:[#allocation2] sm:$0xff] %v323
        %326 = vst [vmem:[#allocation2 + $0x8] sm:$0xff] %v324
        %v327 = vld [vmem:[#allocation2] sm:$0xff]
        %v328 = vld [vmem:[#allocation2 + $0x8] sm:$0xff]
        %329 = vst [vmem:[%s178] sm:$0xff] %v327
        %330 = vst [vmem:[%s178 + $0x8] sm:$0xff] %v328
        %s331 = sand.u32 %s88, 1
        %s332 = scalar_lea.sflag [#allocation5], %s331
        %s333 = sand.u32 %s88, 1
        %s334 = smul.addr %s333, 16
        %s335 = scalar_lea.vmem [#allocation6], %s334
        // Predicated region
        $region33: #{tpu_custom_call.1} parent=27 // pred_check
          %p336 = pneg %p98
        $region34: #{tpu_custom_call.1} parent=27 // pred_check_branch
          %338 = sbr.rel (%p336) target = $region36
        $region35: #{tpu_custom_call.1} parent=27 // pred_region
          %s339 = smul.u32 2, %s22
          %341 = vsyncadd %s332, 0
          %s342 = smul.addr %s21, 2
          %s343 = sadd.s32 %s339, %s342
          %s344 = smul.addr %s343, 8
          %s345 = scalar_lea.hbm %s2, %s344
          %s346 = sshll.u32 %s335, 4
          %s347 = int_to_ptr.vmem [resolvable:$true] %s346
          %s348 = sshll.u32 %s345, 4
          %s349 = int_to_ptr.hbm [resolvable:$true] %s348
          %354 = dma.vmem_to_hbm [thread:$0]  %s347, 256, %s349, %s332, 128, 128, 8
        $region36: #{tpu_custom_call.1} parent=27 // pred_fallthru
          _
      $region28: #{tpu_custom_call.1} parent=5 // pred_fallthru
        _
      %p355 = scmp.le.s32.totalorder 2, %s12
      // Predicated region
      $region37: #{tpu_custom_call.1} parent=5 // pred_check
        %p356 = pneg %p355
      $region38: #{tpu_custom_call.1} parent=5 // pred_check_branch
        %358 = sbr.rel (%p356) target = $region40
      $region39: #{tpu_custom_call.1} parent=5 // pred_region
        %s359 = ssub.s32 %s12, 2
        // Predicated region
        $region41: #{tpu_custom_call.1} parent=39 // pred_check
          %p360 = pneg %p104
        $region42: #{tpu_custom_call.1} parent=39 // pred_check_branch
          %362 = sbr.rel (%p360) target = $region44
        $region43: #{tpu_custom_call.1} parent=39 // pred_region
          %s363 = sand.u32 %s89, 1
          %s364 = scalar_lea.sflag [#allocation5], %s363
          %s365 = sand.u32 %s89, 1
          %s366 = smul.addr %s365, 16
          %s367 = scalar_lea.vmem [#allocation6], %s366
          %369 = dma.done %s364, 256
        $region44: #{tpu_custom_call.1} parent=39 // pred_fallthru
          _
      $region40: #{tpu_custom_call.1} parent=5 // pred_fallthru
        _
    $region6: #{tpu_custom_call.1} parent=1 // loop_footer
      %s16 = sadd.s32 1, %s12
    $region7: #{tpu_custom_call.1} parent=1 // loop_footer_branch
      %11 = sbr.rel target = $region3
    $region8: #{tpu_custom_call.1} parent=1 // loop_exit
      _
    %370 = vsyncpa [#allocation4], 1
    %s371 = scalar_lea.sflag [#allocation4], 1
    %372 = vsyncpa %s371, 1
    %373 = vsyncpa [#allocation5], 1
    %s374 = scalar_lea.sflag [#allocation5], 1
    %375 = vsyncpa %s374, 1

</llo_original>
